<compile_context>
chip_gen: v5e
topology: v5e:2x2
jax: 0.10.0
libtpu: 0.0.40
codegen_flags: <defaults>
</compile_context>

<pallas_src>
import functools

import jax
import jax.numpy as jnp
import numpy as np
from jax.experimental import pallas as pl
from jax.experimental.pallas import tpu as pltpu


def featpro_kernel(x_ref, w_ref, b_ref, eps_ref, z_ref, *, n_pad, tb, tiled_io):
    # x_ref: (tb, C, H*W) in the caller's dtype.  Spatial sum with an f32
    # accumulator; the 1/(H*W) AvgPool scale is folded into w_ref.
    pooled = jnp.sum(x_ref[...], axis=-1, dtype=jnp.float32)            # (tb, C)
    # One fused MXU matmul for both Linear layers: (tb, C) @ (C, 2*n_pad).
    y = jnp.dot(pooled, w_ref[...],
                preferred_element_type=jnp.float32) + b_ref[...]
    mu = y[:, :n_pad]                       # lane-aligned split (n_pad % 128 == 0)
    log_var = y[:, n_pad:]
    std = jnp.exp(log_var * 0.5)            # exp(log_var / 2)
    if tiled_io:
        # eps / z are batch-tiled with the same (tb, n_pad) block as this step.
        z_ref[...] = eps_ref[...] * std + mu
    else:
        # eps / z are full resident blocks; write only this step's row window.
        rows = pl.ds(pl.program_id(0) * tb, tb)
        z_ref[rows, :] = eps_ref[rows, :] * std + mu


def _round_up(x, m):
    return (x + m - 1) // m * m


def _vmem_capacity_bytes():
    try:
        cap = int(pltpu.get_tpu_info().vmem_capacity_bytes)
        if cap > 0:
            return cap
    except Exception:
        pass
    return 128 * 1024 * 1024  # v5e / v6e physical VMEM


def feat_pro_forward(x, w_mu, b_mu, w_var, b_var, eps):
    """x: (B, C, H, W); w_*: (num_classes, C) PyTorch Linear layout; b_*: (num_classes,)."""
    b, c, h, w = x.shape
    hw = h * w
    n = w_mu.shape[0]
    n_pad = _round_up(n, 128)               # lane-aligned half-width of the fused output

    x_flat = x.reshape(b, c, hw)            # streamed in its native dtype
    itemsize = int(x_flat.dtype.itemsize)

    # ---- per-chip VMEM budgets --------------------------------------------
    vmem_cap = _vmem_capacity_bytes()
    if vmem_cap <= 64 * 1024 * 1024:        # v7x: 64 MiB per TensorCore
        x_window_budget = 24 * 1024 * 1024  # total for BOTH x pipeline buffers
        vmem_limit = 48 * 1024 * 1024
    else:                                   # v5e / v6e: 128 MiB physical
        x_window_budget = 64 * 1024 * 1024
        vmem_limit = 96 * 1024 * 1024

    # ---- tile sizing with (sublane, 128-lane) layout padding ----------------
    sublane = max(8, 32 // itemsize)        # 8 rows f32, 16 bf16, 32 int8 per vreg tile
    bytes_per_row = _round_up(c, sublane) * _round_up(hw, 128) * itemsize
    max_tb = max(1, x_window_budget // (2 * bytes_per_row))   # 2 == double buffer

    if max_tb >= b:
        tb = b
        # Guarantee >= 2 grid steps on megacore parts (v7x) when the batch can
        # be split on an 8-row boundary.
        if b >= 16:
            tb = max(8, (((b + 1) // 2) // 8) * 8)
    elif max_tb >= 8:
        tb = (max_tb // 8) * 8              # round DOWN, never up
    else:
        tb = max_tb                         # 1..7 rows: resident eps/out path

    grid_steps = pl.cdiv(b, tb)
    tiled_io = (tb == b) or (tb % 8 == 0)

    # ---- fused, pre-scaled weights ------------------------------------------
    # w_cat = [W_mu^T | W_var^T] / (H*W): the AvgPool scale is folded into the
    # matmul; zero-padded to a lane-aligned 2*n_pad width.
    inv_hw = 1.0 / float(hw)
    w_cat = jnp.zeros((c, 2 * n_pad), jnp.float32)
    w_cat = w_cat.at[:, :n].set(jnp.transpose(w_mu).astype(jnp.float32) * inv_hw)
    w_cat = w_cat.at[:, n_pad:n_pad + n].set(
        jnp.transpose(w_var).astype(jnp.float32) * inv_hw)
    b_cat = jnp.zeros((1, 2 * n_pad), jnp.float32)
    b_cat = b_cat.at[:, :n].set(b_mu.astype(jnp.float32))
    b_cat = b_cat.at[:, n_pad:n_pad + n].set(b_var.astype(jnp.float32))

    # eps padded to the lane-dense output width; in the resident-IO path it is
    # also padded to grid_steps*tb rows so pl.ds writes never run past the buffer.
    eps_rows = b if tiled_io else grid_steps * tb
    eps_pad = jnp.zeros((eps_rows, n_pad), jnp.float32).at[:b, :n].set(
        eps.astype(jnp.float32))

    cost = pl.CostEstimate(
        flops=b * c * hw + 2 * b * c * (2 * n_pad) + 3 * b * n_pad,
        transcendentals=b * n_pad,
        bytes_accessed=(x_flat.size * itemsize + w_cat.size * 4 + b_cat.size * 4
                        + eps_pad.size * 4 + eps_rows * n_pad * 4),
    )

    kernel = functools.partial(featpro_kernel, n_pad=n_pad, tb=tb, tiled_io=tiled_io)

    def build_call(single_buffer_weights):
        # Grid-invariant operands: request a single VMEM buffer to free space
        # for a bigger x tile (falls back to default buffering if unsupported).
        if single_buffer_weights:
            w_spec = pl.BlockSpec((c, 2 * n_pad), lambda i: (0, 0),
                                  pipeline_mode=pl.Buffered(1))
            bias_spec = pl.BlockSpec((1, 2 * n_pad), lambda i: (0, 0),
                                     pipeline_mode=pl.Buffered(1))
        else:
            w_spec = pl.BlockSpec((c, 2 * n_pad), lambda i: (0, 0))
            bias_spec = pl.BlockSpec((1, 2 * n_pad), lambda i: (0, 0))

        if tiled_io:
            eps_spec = pl.BlockSpec((tb, n_pad), lambda i: (i, 0))
            out_spec = pl.BlockSpec((tb, n_pad), lambda i: (i, 0))
            semantics = ("parallel",)       # batch grid sharded across TCs (v7x)
        else:
            eps_spec = pl.BlockSpec((eps_rows, n_pad), lambda i: (0, 0))
            out_spec = pl.BlockSpec((eps_rows, n_pad), lambda i: (0, 0))
            semantics = ("arbitrary",)      # resident out block is revisited

        return pl.pallas_call(
            kernel,
            out_shape=jax.ShapeDtypeStruct((eps_rows, n_pad), jnp.float32),
            grid=(grid_steps,),
            in_specs=[
                pl.BlockSpec((tb, c, hw), lambda i: (i, 0, 0)),   # streamed x tile
                w_spec,                                           # resident fused weights
                bias_spec,                                        # resident fused bias
                eps_spec,
            ],
            out_specs=out_spec,                                   # lane-dense output
            compiler_params=pltpu.CompilerParams(
                dimension_semantics=semantics,
                vmem_limit_bytes=vmem_limit,
            ),
            cost_estimate=cost,
        )

    try:
        z_pad = jax.block_until_ready(build_call(True)(x_flat, w_cat, b_cat, eps_pad))
    except Exception:
        # pipeline_mode=pl.Buffered(1) unsupported on this JAX version; the
        # blocks are grid-invariant anyway, so default buffering is only a
        # small VMEM cost, not extra DMA traffic.
        z_pad = build_call(False)(x_flat, w_cat, b_cat, eps_pad)

    return z_pad[:b, :n]


def feat_pro_reference(x, w_mu, b_mu, w_var, b_var, eps):
    pooled = jnp.mean(x.astype(jnp.float32), axis=(2, 3))
    mu = pooled @ w_mu.T + b_mu
    log_var = pooled @ w_var.T + b_var
    return eps * jnp.exp(log_var / 2.0) + mu


if __name__ == "__main__":
    # Small shapes consistent with the module: B=2, C=4, H=W=16, num_classes=8.
    B, C, H, W, NUM_CLASSES = 2, 4, 16, 16, 8

    key = jax.random.PRNGKey(0)
    kx, kwm, kbm, kwv, kbv, keps = jax.random.split(key, 6)

    x = jax.random.normal(kx, (B, C, H, W), dtype=jnp.float32)

    # Deterministic parameter init (PyTorch Linear default: U(-1/sqrt(in), 1/sqrt(in))).
    bound = 1.0 / np.sqrt(C)
    w_mu = jax.random.uniform(kwm, (NUM_CLASSES, C), minval=-bound, maxval=bound)
    b_mu = jax.random.uniform(kbm, (NUM_CLASSES,), minval=-bound, maxval=bound)
    w_var = jax.random.uniform(kwv, (NUM_CLASSES, C), minval=-bound, maxval=bound)
    b_var = jax.random.uniform(kbv, (NUM_CLASSES,), minval=-bound, maxval=bound)

    # eps ~ N(0,1), same role as torch.randn_like(std) (drawn in the wrapper).
    eps = jax.random.normal(keps, (B, NUM_CLASSES), dtype=jnp.float32)

    z = feat_pro_forward(x, w_mu, b_mu, w_var, b_var, eps)
    z = jax.block_until_ready(z)

    z_ref = feat_pro_reference(x, w_mu, b_mu, w_var, b_var, eps)
    np.testing.assert_allclose(np.asarray(z), np.asarray(z_ref), rtol=1e-5, atol=1e-5)

    print("KERNEL_OK")
</pallas_src>

<mosaic_0001>
module attributes {stable_mosaic.version = 11 : i64} {
  func.func @featpro_kernel(%arg0: i32, %arg1: memref<2x4x256xf32, #tpu.memory_space<vmem>>, %arg2: memref<4x256xf32, #tpu.memory_space<vmem>>, %arg3: memref<1x256xf32, #tpu.memory_space<vmem>>, %arg4: memref<2x128xf32, #tpu.memory_space<vmem>>, %arg5: memref<2x128xf32, #tpu.memory_space<vmem>>) attributes {dimension_semantics = [#tpu.dimension_semantics<parallel>], iteration_bounds = array<i64: 1>, scalar_prefetch = 0 : i64, scratch_operands = 0 : i64, tpu.core_type = #tpu.core_type<tc>, window_params = [{transform_indices = @transform_0, window_bounds = array<i64: 2, 4, 256>}, {pipeline_mode = #tpu.pipeline_mode<synchronous>, transform_indices = @transform_1, window_bounds = array<i64: 4, 256>}, {pipeline_mode = #tpu.pipeline_mode<synchronous>, transform_indices = @transform_2, window_bounds = array<i64: 1, 256>}, {transform_indices = @transform_3, window_bounds = array<i64: 2, 128>}, {transform_indices = @transform_4, window_bounds = array<i64: 2, 128>}]} {
    %c0 = arith.constant 0 : index
    %c0_0 = arith.constant 0 : index
    %c0_1 = arith.constant 0 : index
    %0 = vector.load %arg1[%c0, %c0_0, %c0_1] : memref<2x4x256xf32, #tpu.memory_space<vmem>>, vector<2x4x256xf32>
    %cst = arith.constant dense<0.000000e+00> : vector<2x4xf32>
    %1 = vector.multi_reduction <add>, %0, %cst [2] : vector<2x4x256xf32> to vector<2x4xf32>
    %c0_2 = arith.constant 0 : index
    %c0_3 = arith.constant 0 : index
    %2 = vector.load %arg2[%c0_2, %c0_3] : memref<4x256xf32, #tpu.memory_space<vmem>>, vector<4x256xf32>
    %cst_4 = arith.constant dense<0.000000e+00> : vector<2x256xf32>
    %3 = tpu.matmul %1, %2, %cst_4 {dimension_numbers = #tpu.dot_dimension_numbers<[1], [0], [0], [1], [0, 0, 1, 1], [], []>} : vector<2x4xf32>, vector<4x256xf32>, vector<2x256xf32> -> vector<2x256xf32>
    %c0_5 = arith.constant 0 : index
    %c0_6 = arith.constant 0 : index
    %4 = vector.load %arg3[%c0_5, %c0_6] : memref<1x256xf32, #tpu.memory_space<vmem>>, vector<1x256xf32>
    %5 = vector.broadcast %4 : vector<1x256xf32> to vector<2x256xf32>
    %6 = arith.addf %3, %5 : vector<2x256xf32>
    %7 = vector.extract_strided_slice %6 {offsets = [0, 0], sizes = [2, 128], strides = [1, 1]} : vector<2x256xf32> to vector<2x128xf32>
    %8 = vector.extract_strided_slice %6 {offsets = [0, 128], sizes = [2, 128], strides = [1, 1]} : vector<2x256xf32> to vector<2x128xf32>
    %cst_7 = arith.constant 5.000000e-01 : f32
    %9 = vector.broadcast %cst_7 : f32 to vector<2x128xf32>
    %10 = arith.mulf %8, %9 : vector<2x128xf32>
    %11 = math.exp %10 : vector<2x128xf32>
    %c0_8 = arith.constant 0 : index
    %c0_9 = arith.constant 0 : index
    %12 = vector.load %arg4[%c0_8, %c0_9] : memref<2x128xf32, #tpu.memory_space<vmem>>, vector<2x128xf32>
    %13 = arith.mulf %12, %11 : vector<2x128xf32>
    %14 = arith.addf %13, %7 : vector<2x128xf32>
    %c0_10 = arith.constant 0 : index
    %c0_11 = arith.constant 0 : index
    %15 = vector.load %arg5[%c0_10, %c0_11] : memref<2x128xf32, #tpu.memory_space<vmem>>, vector<2x128xf32>
    tpu.vector_store %arg5[%c0_10, %c0_11], %14 {strides = array<i32>} : memref<2x128xf32, #tpu.memory_space<vmem>>, vector<2x128xf32>,
    return
  }
  func.func @transform_0(%arg0: i32) -> (i32, i32, i32) {
    %c0_i32 = arith.constant 0 : i32
    %c0_i32_0 = arith.constant 0 : i32
    %c0_i32_1 = arith.constant 0 : i32
    return %arg0, %c0_i32, %c0_i32_0 : i32, i32, i32
  }
  func.func @transform_1(%arg0: i32) -> (i32, i32) {
    %c0_i32 = arith.constant 0 : i32
    %c0_i32_0 = arith.constant 0 : i32
    %c0_i32_1 = arith.constant 0 : i32
    return %c0_i32, %c0_i32_0 : i32, i32
  }
  func.func @transform_2(%arg0: i32) -> (i32, i32) {
    %c0_i32 = arith.constant 0 : i32
    %c0_i32_0 = arith.constant 0 : i32
    %c0_i32_1 = arith.constant 0 : i32
    return %c0_i32, %c0_i32_0 : i32, i32
  }
  func.func @transform_3(%arg0: i32) -> (i32, i32) {
    %c0_i32 = arith.constant 0 : i32
    %c0_i32_0 = arith.constant 0 : i32
    return %arg0, %c0_i32 : i32, i32
  }
  func.func @transform_4(%arg0: i32) -> (i32, i32) {
    %c0_i32 = arith.constant 0 : i32
    %c0_i32_0 = arith.constant 0 : i32
    return %arg0, %c0_i32 : i32, i32
  }
}

module attributes {stable_mosaic.version = 11 : i64} {
  func.func @featpro_kernel(%arg0: i32, %arg1: memref<2x4x256xf32, #tpu.memory_space<vmem>>, %arg2: memref<4x256xf32, #tpu.memory_space<vmem>>, %arg3: memref<1x256xf32, #tpu.memory_space<vmem>>, %arg4: memref<2x128xf32, #tpu.memory_space<vmem>>, %arg5: memref<2x128xf32, #tpu.memory_space<vmem>>) attributes {dimension_semantics = [#tpu.dimension_semantics<parallel>], iteration_bounds = array<i64: 1>, scalar_prefetch = 0 : i64, scratch_operands = 0 : i64, tpu.core_type = #tpu.core_type<tc>, window_params = [{transform_indices = @transform_0, window_bounds = array<i64: 2, 4, 256>}, {pipeline_mode = #tpu.pipeline_mode<synchronous>, transform_indices = @transform_1, window_bounds = array<i64: 4, 256>}, {pipeline_mode = #tpu.pipeline_mode<synchronous>, transform_indices = @transform_2, window_bounds = array<i64: 1, 256>}, {transform_indices = @transform_3, window_bounds = array<i64: 2, 128>}, {transform_indices = @transform_4, window_bounds = array<i64: 2, 128>}]} {
    %c0 = arith.constant 0 : index
    %c0_0 = arith.constant 0 : index
    %c0_1 = arith.constant 0 : index
    %0 = vector.load %arg1[%c0, %c0_0, %c0_1] : memref<2x4x256xf32, #tpu.memory_space<vmem>>, vector<2x4x256xf32>
    %cst = arith.constant dense<0.000000e+00> : vector<2x4xf32>
    %1 = vector.multi_reduction <add>, %0, %cst [2] : vector<2x4x256xf32> to vector<2x4xf32>
    %c0_2 = arith.constant 0 : index
    %c0_3 = arith.constant 0 : index
    %2 = vector.load %arg2[%c0_2, %c0_3] : memref<4x256xf32, #tpu.memory_space<vmem>>, vector<4x256xf32>
    %cst_4 = arith.constant dense<0.000000e+00> : vector<2x256xf32>
    %3 = tpu.matmul %1, %2, %cst_4 {dimension_numbers = #tpu.dot_dimension_numbers<[1], [0], [0], [1], [0, 0, 1, 1], [], []>} : vector<2x4xf32>, vector<4x256xf32>, vector<2x256xf32> -> vector<2x256xf32>
    %c0_5 = arith.constant 0 : index
    %c0_6 = arith.constant 0 : index
    %4 = vector.load %arg3[%c0_5, %c0_6] : memref<1x256xf32, #tpu.memory_space<vmem>>, vector<1x256xf32>
    %5 = vector.broadcast %4 : vector<1x256xf32> to vector<2x256xf32>
    %6 = arith.addf %3, %5 : vector<2x256xf32>
    %7 = vector.extract_strided_slice %6 {offsets = [0, 0], sizes = [2, 128], strides = [1, 1]} : vector<2x256xf32> to vector<2x128xf32>
    %8 = vector.extract_strided_slice %6 {offsets = [0, 128], sizes = [2, 128], strides = [1, 1]} : vector<2x256xf32> to vector<2x128xf32>
    %cst_7 = arith.constant 5.000000e-01 : f32
    %9 = vector.broadcast %cst_7 : f32 to vector<2x128xf32>
    %10 = arith.mulf %8, %9 : vector<2x128xf32>
    %11 = math.exp %10 : vector<2x128xf32>
    %c0_8 = arith.constant 0 : index
    %c0_9 = arith.constant 0 : index
    %12 = vector.load %arg4[%c0_8, %c0_9] : memref<2x128xf32, #tpu.memory_space<vmem>>, vector<2x128xf32>
    %13 = arith.mulf %12, %11 : vector<2x128xf32>
    %14 = arith.addf %13, %7 : vector<2x128xf32>
    %c0_10 = arith.constant 0 : index
    %c0_11 = arith.constant 0 : index
    %15 = vector.load %arg5[%c0_10, %c0_11] : memref<2x128xf32, #tpu.memory_space<vmem>>, vector<2x128xf32>
    tpu.vector_store %arg5[%c0_10, %c0_11], %14 {strides = array<i32>} : memref<2x128xf32, #tpu.memory_space<vmem>>, vector<2x128xf32>,
    return
  }
  func.func @transform_0(%arg0: i32) -> (i32, i32, i32) {
    %c0_i32 = arith.constant 0 : i32
    %c0_i32_0 = arith.constant 0 : i32
    %c0_i32_1 = arith.constant 0 : i32
    return %arg0, %c0_i32, %c0_i32_0 : i32, i32, i32
  }
  func.func @transform_1(%arg0: i32) -> (i32, i32) {
    %c0_i32 = arith.constant 0 : i32
    %c0_i32_0 = arith.constant 0 : i32
    %c0_i32_1 = arith.constant 0 : i32
    return %c0_i32, %c0_i32_0 : i32, i32
  }
  func.func @transform_2(%arg0: i32) -> (i32, i32) {
    %c0_i32 = arith.constant 0 : i32
    %c0_i32_0 = arith.constant 0 : i32
    %c0_i32_1 = arith.constant 0 : i32
    return %c0_i32, %c0_i32_0 : i32, i32
  }
  func.func @transform_3(%arg0: i32) -> (i32, i32) {
    %c0_i32 = arith.constant 0 : i32
    %c0_i32_0 = arith.constant 0 : i32
    return %arg0, %c0_i32 : i32, i32
  }
  func.func @transform_4(%arg0: i32) -> (i32, i32) {
    %c0_i32 = arith.constant 0 : i32
    %c0_i32_0 = arith.constant 0 : i32
    return %arg0, %c0_i32 : i32, i32
  }
}

</mosaic_0001>

<llo_original>
// kernel: tpu_custom_call.1
$region0: #{tpu_custom_call.1}
  #allocation0 [shape = 'u32[]', space=smem, size = 0x4, offset = 0x4, fixed_abs, tag = 'smem constant byte address 0x4 - core index']
  #allocation1 [shape = 'u32[72,128]{1,0:T(1,128)}', space=vmem, size = 0x9000, scoped, tag = 'internal scratch']
  %s0 = inlined_call_operand.hbm [shape: f32[2,4,256], index: 0, kind: input, shape index: {}]
  %s1 = inlined_call_operand.hbm [shape: f32[4,256], index: 1, kind: input, shape index: {}]
  %s2 = inlined_call_operand.hbm [shape: f32[1,256], index: 2, kind: input, shape index: {}]
  %s3 = inlined_call_operand.vmem [shape: f32[2,128], index: 3, kind: input, shape index: {}]
  %s4 = inlined_call_operand.hbm [shape: f32[2,128], index: 4, kind: output, shape index: {}]
  %s5 = sld [smem:[#allocation0]]
  $region38: #{tpu_custom_call.1} parent=0
    _
  %s7 = ssub.s32 1, %s5
  %s8 = scalar_select 0, %s7, %s5
  $region1: #{tpu_custom_call.1} parent=0
    #allocation2 [shape = 'u8[8192]{0}', space=vmem, size = 0x2000, scoped, tag = 'input window, operand 0, single buffered']
    #allocation3 [shape = 's32[1]{0}', space=sflag, size = 0x4, scoped, tag = 'scoped memory for tpu_custom_call.1']
    #allocation4 [shape = 's32[1]{0}', space=sflag, size = 0x4, scoped, tag = 'scoped memory for tpu_custom_call.1']
    #allocation5 [shape = 'u8[4096]{0}', space=vmem, size = 0x1000, scoped, tag = 'input window, operand 1, single buffered']
    #allocation6 [shape = 's32[1]{0}', space=sflag, size = 0x4, scoped, tag = 'scoped memory for tpu_custom_call.1']
    #allocation7 [shape = 'u8[1024]{0}', space=vmem, size = 0x400, scoped, tag = 'input window, operand 2, single buffered']
    #allocation8 [shape = 'u8[1024]{0}', space=vmem, size = 0x400, scoped, tag = 'output window, operand 0, single buffered']
    %9 = vsyncpa [#allocation3], 0
    %10 = vsyncpa [#allocation6], 0
    %11 = vsyncpa [#allocation4], 0
    // Predicated region
    $region2: #{tpu_custom_call.1} parent=1 // pred_check
      _
    $region3: #{tpu_custom_call.1} parent=1 // pred_check_branch
      %13 = sbr.rel (0) target = $region5
    $region4: #{tpu_custom_call.1} parent=1 // pred_region
      %15 = vsyncadd [#allocation3], 0
      %s16 = sshll.u32 %s0, 4
      %s17 = int_to_ptr.hbm [resolvable:$true] %s16
      %s18 = sshll.u32 [#allocation2], 4
      %s19 = int_to_ptr.vmem [resolvable:$true] %s18
      %24 = dma.hbm_to_vmem [thread:$0]  %s17, 256, %s19, [#allocation3], 128, 128, 8
    $region5: #{tpu_custom_call.1} parent=1 // pred_fallthru
      _
    // Predicated region
    $region6: #{tpu_custom_call.1} parent=1 // pred_check
      _
    $region7: #{tpu_custom_call.1} parent=1 // pred_check_branch
      %26 = sbr.rel (0) target = $region9
    $region8: #{tpu_custom_call.1} parent=1 // pred_region
      %28 = vsyncadd [#allocation6], 0
      %s30 = sshll.u32 %s1, 4
      %s31 = int_to_ptr.hbm [resolvable:$true] %s30
      %s32 = sshll.u32 [#allocation5], 4
      %s33 = int_to_ptr.vmem [resolvable:$true] %s32
      %35 = dma.hbm_to_vmem [thread:$0]  %s31, 128, %s33, [#allocation6]
    $region9: #{tpu_custom_call.1} parent=1 // pred_fallthru
      _
    // Predicated region
    $region10: #{tpu_custom_call.1} parent=1 // pred_check
      _
    $region11: #{tpu_custom_call.1} parent=1 // pred_check_branch
      %37 = sbr.rel (0) target = $region13
    $region12: #{tpu_custom_call.1} parent=1 // pred_region
      %39 = vsyncadd [#allocation6], 0
      %s41 = sshll.u32 %s2, 4
      %s42 = int_to_ptr.hbm [resolvable:$true] %s41
      %s43 = sshll.u32 [#allocation7], 4
      %s44 = int_to_ptr.vmem [resolvable:$true] %s43
      %46 = dma.hbm_to_vmem [thread:$0]  %s42, 32, %s44, [#allocation6]
    $region13: #{tpu_custom_call.1} parent=1 // pred_fallthru
      _
    // Predicated region
    $region14: #{tpu_custom_call.1} parent=1 // pred_check
      _
    $region15: #{tpu_custom_call.1} parent=1 // pred_check_branch
      %48 = sbr.rel (0) target = $region17
    $region16: #{tpu_custom_call.1} parent=1 // pred_region
      _
    $region17: #{tpu_custom_call.1} parent=1 // pred_fallthru
      _
    // Predicated region
    $region18: #{tpu_custom_call.1} parent=1 // pred_check
      _
    $region19: #{tpu_custom_call.1} parent=1 // pred_check_branch
      %50 = sbr.rel (0) target = $region21
    $region20: #{tpu_custom_call.1} parent=1 // pred_region
      %52 = dma.done [#allocation3], 256
    $region21: #{tpu_custom_call.1} parent=1 // pred_fallthru
      _
    // Predicated region
    $region22: #{tpu_custom_call.1} parent=1 // pred_check
      _
    $region23: #{tpu_custom_call.1} parent=1 // pred_check_branch
      %54 = sbr.rel (0) target = $region25
    $region24: #{tpu_custom_call.1} parent=1 // pred_region
      %56 = dma.done [#allocation6], 128
    $region25: #{tpu_custom_call.1} parent=1 // pred_fallthru
      _
    // Predicated region
    $region26: #{tpu_custom_call.1} parent=1 // pred_check
      _
    $region27: #{tpu_custom_call.1} parent=1 // pred_check_branch
      %58 = sbr.rel (0) target = $region29
    $region28: #{tpu_custom_call.1} parent=1 // pred_region
      %60 = dma.done [#allocation6], 32
    $region29: #{tpu_custom_call.1} parent=1 // pred_fallthru
      _
    %v61 = vld [vmem:[#allocation2] sm:$0xff]
    %v62 = vld [vmem:[#allocation2 + $0x8] sm:$0xff]
    %65 = vst [vmem:[#allocation1] ss:$2 sm:$0xff] %v61
    %v66 = vld.sshfl [vmem:[#allocation1] sm:$0xff pattern:$0x75316420]
    %v67 = vld.sshfl [vmem:[#allocation1 + $0x8] sm:$0xff pattern:$0x75316420]
    %s68 = scalar_lea.vmem [#allocation1], 16
    %69 = vst [vmem:[%s68] ss:$2 sm:$0xff] %v62
    %v70 = vld.sshfl [vmem:[#allocation1 + $0x10] sm:$0xff pattern:$0x75316420]
    %v71 = vld.sshfl [vmem:[#allocation1 + $0x18] sm:$0xff pattern:$0x75316420]
    %vm76 = vcmask 1043456
    %v77 = vsel %vm76, %v66, 0.0
    %v78 = vsel %vm76, %v67, 0.0
    %v79 = vadd.f32 %v77, %v78
    %80 = vadd.xlane.f32.xlu0 %v79
    %v81 = vpop.xlane.xlu0 %80
    %v82 = vsel %vm76, %v70, 0.0
    %v83 = vsel %vm76, %v71, 0.0
    %v84 = vadd.f32 %v82, %v83
    %85 = vadd.xlane.f32.xlu0 %v84
    %v86 = vpop.xlane.xlu0 %85
    %v87 = vld [vmem:[#allocation5] sm:$0xff]
    %v88 = vld [vmem:[#allocation7] sm:$0x3]
    %v90 = vperm.slane %v88, 0
    %v91 = vperm.slane %v88, 1
    %v96 = vlaneseq
    %v97 = vand.u32 %v96, 127
    %v98 = vperm.slane %v81, %v97
    %v99 = vperm.slane %v86, %v97
    %vm100 = vcmask 1041409
    %v101 = vsel %vm100, %v99, %v98
    %103 = vst [vmem:[#allocation1] ss:$2 sm:$0xff] %v87
    %v104 = vld.sshfl [vmem:[#allocation1] sm:$0xff pattern:$0x75316420]
    %v105 = vld.sshfl [vmem:[#allocation1 + $0x8] sm:$0xff pattern:$0x75316420]
    %vm106 = vcmask 31744
    %v107 = vsel %vm106, %v101, 0
    %v109 = vsel %vm76, %v104, 0
    %v111 = vsel %vm76, %v105, 0
    %113 = vmatpush.msra.mxu0 0.0
    %114 = vmatpush.msra.mxu0 0.0
    %115 = vmatpush.msra.mxu0 0.0
    %116 = vmatpush.msra.mxu0 0.0
    %117 = vmatpush.msra.mxu0 0.0
    %118 = vmatpush.msra.mxu0 0.0
    %119 = vmatpush.msra.mxu0 0.0
    %120 = vmatpush.msra.mxu0 0.0
    %121 = vmatpush.msra.mxu0 0.0
    %122 = vmatpush.msra.mxu0 0.0
    %123 = vmatpush.msra.mxu0 0.0
    %124 = vmatpush.msra.mxu0 0.0
    %125 = vmatpush.msra.mxu0 0.0
    %126 = vmatpush.msra.mxu0 0.0
    %127 = vmatpush.msra.mxu0 0.0
    %128 = vmatpush.msra.mxu0 %v109
    %129 = vmatmul.f32.gmra.mxu0 %v107
    %v130 = vpop.f32.mrf.mxu0
    %v131 = vadd.f32 %v90, %v130
    %132 = vdwg.mxu0
    %133 = vmatpush.msra.mxu0 0.0
    %134 = vmatpush.msra.mxu0 0.0
    %135 = vmatpush.msra.mxu0 0.0
    %136 = vmatpush.msra.mxu0 0.0
    %137 = vmatpush.msra.mxu0 0.0
    %138 = vmatpush.msra.mxu0 0.0
    %139 = vmatpush.msra.mxu0 0.0
    %140 = vmatpush.msra.mxu0 0.0
    %141 = vmatpush.msra.mxu0 0.0
    %142 = vmatpush.msra.mxu0 0.0
    %143 = vmatpush.msra.mxu0 0.0
    %144 = vmatpush.msra.mxu0 0.0
    %145 = vmatpush.msra.mxu0 0.0
    %146 = vmatpush.msra.mxu0 0.0
    %147 = vmatpush.msra.mxu0 0.0
    %148 = vmatpush.msra.mxu0 %v111
    %149 = vmatmul.f32.gmra.mxu0 %v107
    %v150 = vpop.f32.mrf.mxu0
    %v151 = vadd.f32 %v91, %v150
    %152 = vdwg.mxu0
    %v153 = vmul.f32 %v151, 0.5
    %v154 = vmul.f32 %v153, 1.442695
    %v155 = vpow.pop %v154
    %v156 = vld [vmem:[%s3] sm:$0x3]
    %v157 = vmul.f32 %v156, %v155
    %v158 = vadd.f32 %v157, %v131
    %159 = vst [vmem:[#allocation8] sm:$0x3] %v158
    // Predicated region
    $region30: #{tpu_custom_call.1} parent=1 // pred_check
      _
    $region31: #{tpu_custom_call.1} parent=1 // pred_check_branch
      %161 = sbr.rel (0) target = $region33
    $region32: #{tpu_custom_call.1} parent=1 // pred_region
      %163 = vsyncadd [#allocation4], 0
      %s165 = sshll.u32 [#allocation8], 4
      %s166 = int_to_ptr.vmem [resolvable:$true] %s165
      %s167 = sshll.u32 %s4, 4
      %s168 = int_to_ptr.hbm [resolvable:$true] %s167
      %170 = dma.vmem_to_hbm [thread:$0]  %s166, 32, %s168, [#allocation4]
    $region33: #{tpu_custom_call.1} parent=1 // pred_fallthru
      _
    // Predicated region
    $region34: #{tpu_custom_call.1} parent=1 // pred_check
      _
    $region35: #{tpu_custom_call.1} parent=1 // pred_check_branch
      %172 = sbr.rel (0) target = $region37
    $region36: #{tpu_custom_call.1} parent=1 // pred_region
      %174 = dma.done [#allocation4], 32
    $region37: #{tpu_custom_call.1} parent=1 // pred_fallthru
      _
    %175 = vsyncpa [#allocation3], 1
    %176 = vsyncpa [#allocation6], 1
    %177 = vsyncpa [#allocation4], 1

// kernel: tpu_custom_call.1
$region0: #{tpu_custom_call.1}
  #allocation0 [shape = 'u32[]', space=smem, size = 0x4, offset = 0x4, fixed_abs, tag = 'smem constant byte address 0x4 - core index']
  #allocation1 [shape = 'u32[72,128]{1,0:T(1,128)}', space=vmem, size = 0x9000, scoped, tag = 'internal scratch']
  %s0 = inlined_call_operand.hbm [shape: f32[2,4,256], index: 0, kind: input, shape index: {}]
  %s1 = inlined_call_operand.hbm [shape: f32[4,256], index: 1, kind: input, shape index: {}]
  %s2 = inlined_call_operand.hbm [shape: f32[1,256], index: 2, kind: input, shape index: {}]
  %s3 = inlined_call_operand.vmem [shape: f32[2,128], index: 3, kind: input, shape index: {}]
  %s4 = inlined_call_operand.hbm [shape: f32[2,128], index: 4, kind: output, shape index: {}]
  %s5 = sld [smem:[#allocation0]]
  $region38: #{tpu_custom_call.1} parent=0
    _
  %s7 = ssub.s32 1, %s5
  %s8 = scalar_select 0, %s7, %s5
  $region1: #{tpu_custom_call.1} parent=0
    #allocation2 [shape = 'u8[8192]{0}', space=vmem, size = 0x2000, scoped, tag = 'input window, operand 0, single buffered']
    #allocation3 [shape = 's32[1]{0}', space=sflag, size = 0x4, scoped, tag = 'scoped memory for tpu_custom_call.1']
    #allocation4 [shape = 's32[1]{0}', space=sflag, size = 0x4, scoped, tag = 'scoped memory for tpu_custom_call.1']
    #allocation5 [shape = 'u8[4096]{0}', space=vmem, size = 0x1000, scoped, tag = 'input window, operand 1, single buffered']
    #allocation6 [shape = 's32[1]{0}', space=sflag, size = 0x4, scoped, tag = 'scoped memory for tpu_custom_call.1']
    #allocation7 [shape = 'u8[1024]{0}', space=vmem, size = 0x400, scoped, tag = 'input window, operand 2, single buffered']
    #allocation8 [shape = 'u8[1024]{0}', space=vmem, size = 0x400, scoped, tag = 'output window, operand 0, single buffered']
    %9 = vsyncpa [#allocation3], 0
    %10 = vsyncpa [#allocation6], 0
    %11 = vsyncpa [#allocation4], 0
    // Predicated region
    $region2: #{tpu_custom_call.1} parent=1 // pred_check
      _
    $region3: #{tpu_custom_call.1} parent=1 // pred_check_branch
      %13 = sbr.rel (0) target = $region5
    $region4: #{tpu_custom_call.1} parent=1 // pred_region
      %15 = vsyncadd [#allocation3], 0
      %s16 = sshll.u32 %s0, 4
      %s17 = int_to_ptr.hbm [resolvable:$true] %s16
      %s18 = sshll.u32 [#allocation2], 4
      %s19 = int_to_ptr.vmem [resolvable:$true] %s18
      %24 = dma.hbm_to_vmem [thread:$0]  %s17, 256, %s19, [#allocation3], 128, 128, 8
    $region5: #{tpu_custom_call.1} parent=1 // pred_fallthru
      _
    // Predicated region
    $region6: #{tpu_custom_call.1} parent=1 // pred_check
      _
    $region7: #{tpu_custom_call.1} parent=1 // pred_check_branch
      %26 = sbr.rel (0) target = $region9
    $region8: #{tpu_custom_call.1} parent=1 // pred_region
      %28 = vsyncadd [#allocation6], 0
      %s30 = sshll.u32 %s1, 4
      %s31 = int_to_ptr.hbm [resolvable:$true] %s30
      %s32 = sshll.u32 [#allocation5], 4
      %s33 = int_to_ptr.vmem [resolvable:$true] %s32
      %35 = dma.hbm_to_vmem [thread:$0]  %s31, 128, %s33, [#allocation6]
    $region9: #{tpu_custom_call.1} parent=1 // pred_fallthru
      _
    // Predicated region
    $region10: #{tpu_custom_call.1} parent=1 // pred_check
      _
    $region11: #{tpu_custom_call.1} parent=1 // pred_check_branch
      %37 = sbr.rel (0) target = $region13
    $region12: #{tpu_custom_call.1} parent=1 // pred_region
      %39 = vsyncadd [#allocation6], 0
      %s41 = sshll.u32 %s2, 4
      %s42 = int_to_ptr.hbm [resolvable:$true] %s41
      %s43 = sshll.u32 [#allocation7], 4
      %s44 = int_to_ptr.vmem [resolvable:$true] %s43
      %46 = dma.hbm_to_vmem [thread:$0]  %s42, 32, %s44, [#allocation6]
    $region13: #{tpu_custom_call.1} parent=1 // pred_fallthru
      _
    // Predicated region
    $region14: #{tpu_custom_call.1} parent=1 // pred_check
      _
    $region15: #{tpu_custom_call.1} parent=1 // pred_check_branch
      %48 = sbr.rel (0) target = $region17
    $region16: #{tpu_custom_call.1} parent=1 // pred_region
      _
    $region17: #{tpu_custom_call.1} parent=1 // pred_fallthru
      _
    // Predicated region
    $region18: #{tpu_custom_call.1} parent=1 // pred_check
      _
    $region19: #{tpu_custom_call.1} parent=1 // pred_check_branch
      %50 = sbr.rel (0) target = $region21
    $region20: #{tpu_custom_call.1} parent=1 // pred_region
      %52 = dma.done [#allocation3], 256
    $region21: #{tpu_custom_call.1} parent=1 // pred_fallthru
      _
    // Predicated region
    $region22: #{tpu_custom_call.1} parent=1 // pred_check
      _
    $region23: #{tpu_custom_call.1} parent=1 // pred_check_branch
      %54 = sbr.rel (0) target = $region25
    $region24: #{tpu_custom_call.1} parent=1 // pred_region
      %56 = dma.done [#allocation6], 128
    $region25: #{tpu_custom_call.1} parent=1 // pred_fallthru
      _
    // Predicated region
    $region26: #{tpu_custom_call.1} parent=1 // pred_check
      _
    $region27: #{tpu_custom_call.1} parent=1 // pred_check_branch
      %58 = sbr.rel (0) target = $region29
    $region28: #{tpu_custom_call.1} parent=1 // pred_region
      %60 = dma.done [#allocation6], 32
    $region29: #{tpu_custom_call.1} parent=1 // pred_fallthru
      _
    %v61 = vld [vmem:[#allocation2] sm:$0xff]
    %v62 = vld [vmem:[#allocation2 + $0x8] sm:$0xff]
    %65 = vst [vmem:[#allocation1] ss:$2 sm:$0xff] %v61
    %v66 = vld.sshfl [vmem:[#allocation1] sm:$0xff pattern:$0x75316420]
    %v67 = vld.sshfl [vmem:[#allocation1 + $0x8] sm:$0xff pattern:$0x75316420]
    %s68 = scalar_lea.vmem [#allocation1], 16
    %69 = vst [vmem:[%s68] ss:$2 sm:$0xff] %v62
    %v70 = vld.sshfl [vmem:[#allocation1 + $0x10] sm:$0xff pattern:$0x75316420]
    %v71 = vld.sshfl [vmem:[#allocation1 + $0x18] sm:$0xff pattern:$0x75316420]
    %vm76 = vcmask 1043456
    %v77 = vsel %vm76, %v66, 0.0
    %v78 = vsel %vm76, %v67, 0.0
    %v79 = vadd.f32 %v77, %v78
    %80 = vadd.xlane.f32.xlu0 %v79
    %v81 = vpop.xlane.xlu0 %80
    %v82 = vsel %vm76, %v70, 0.0
    %v83 = vsel %vm76, %v71, 0.0
    %v84 = vadd.f32 %v82, %v83
    %85 = vadd.xlane.f32.xlu0 %v84
    %v86 = vpop.xlane.xlu0 %85
    %v87 = vld [vmem:[#allocation5] sm:$0xff]
    %v88 = vld [vmem:[#allocation7] sm:$0x3]
    %v90 = vperm.slane %v88, 0
    %v91 = vperm.slane %v88, 1
    %v96 = vlaneseq
    %v97 = vand.u32 %v96, 127
    %v98 = vperm.slane %v81, %v97
    %v99 = vperm.slane %v86, %v97
    %vm100 = vcmask 1041409
    %v101 = vsel %vm100, %v99, %v98
    %103 = vst [vmem:[#allocation1] ss:$2 sm:$0xff] %v87
    %v104 = vld.sshfl [vmem:[#allocation1] sm:$0xff pattern:$0x75316420]
    %v105 = vld.sshfl [vmem:[#allocation1 + $0x8] sm:$0xff pattern:$0x75316420]
    %vm106 = vcmask 31744
    %v107 = vsel %vm106, %v101, 0
    %v109 = vsel %vm76, %v104, 0
    %v111 = vsel %vm76, %v105, 0
    %113 = vmatpush.msra.mxu0 0.0
    %114 = vmatpush.msra.mxu0 0.0
    %115 = vmatpush.msra.mxu0 0.0
    %116 = vmatpush.msra.mxu0 0.0
    %117 = vmatpush.msra.mxu0 0.0
    %118 = vmatpush.msra.mxu0 0.0
    %119 = vmatpush.msra.mxu0 0.0
    %120 = vmatpush.msra.mxu0 0.0
    %121 = vmatpush.msra.mxu0 0.0
    %122 = vmatpush.msra.mxu0 0.0
    %123 = vmatpush.msra.mxu0 0.0
    %124 = vmatpush.msra.mxu0 0.0
    %125 = vmatpush.msra.mxu0 0.0
    %126 = vmatpush.msra.mxu0 0.0
    %127 = vmatpush.msra.mxu0 0.0
    %128 = vmatpush.msra.mxu0 %v109
    %129 = vmatmul.f32.gmra.mxu0 %v107
    %v130 = vpop.f32.mrf.mxu0
    %v131 = vadd.f32 %v90, %v130
    %132 = vdwg.mxu0
    %133 = vmatpush.msra.mxu0 0.0
    %134 = vmatpush.msra.mxu0 0.0
    %135 = vmatpush.msra.mxu0 0.0
    %136 = vmatpush.msra.mxu0 0.0
    %137 = vmatpush.msra.mxu0 0.0
    %138 = vmatpush.msra.mxu0 0.0
    %139 = vmatpush.msra.mxu0 0.0
    %140 = vmatpush.msra.mxu0 0.0
    %141 = vmatpush.msra.mxu0 0.0
    %142 = vmatpush.msra.mxu0 0.0
    %143 = vmatpush.msra.mxu0 0.0
    %144 = vmatpush.msra.mxu0 0.0
    %145 = vmatpush.msra.mxu0 0.0
    %146 = vmatpush.msra.mxu0 0.0
    %147 = vmatpush.msra.mxu0 0.0
    %148 = vmatpush.msra.mxu0 %v111
    %149 = vmatmul.f32.gmra.mxu0 %v107
    %v150 = vpop.f32.mrf.mxu0
    %v151 = vadd.f32 %v91, %v150
    %152 = vdwg.mxu0
    %v153 = vmul.f32 %v151, 0.5
    %v154 = vmul.f32 %v153, 1.442695
    %v155 = vpow.pop %v154
    %v156 = vld [vmem:[%s3] sm:$0x3]
    %v157 = vmul.f32 %v156, %v155
    %v158 = vadd.f32 %v157, %v131
    %159 = vst [vmem:[#allocation8] sm:$0x3] %v158
    // Predicated region
    $region30: #{tpu_custom_call.1} parent=1 // pred_check
      _
    $region31: #{tpu_custom_call.1} parent=1 // pred_check_branch
      %161 = sbr.rel (0) target = $region33
    $region32: #{tpu_custom_call.1} parent=1 // pred_region
      %163 = vsyncadd [#allocation4], 0
      %s165 = sshll.u32 [#allocation8], 4
      %s166 = int_to_ptr.vmem [resolvable:$true] %s165
      %s167 = sshll.u32 %s4, 4
      %s168 = int_to_ptr.hbm [resolvable:$true] %s167
      %170 = dma.vmem_to_hbm [thread:$0]  %s166, 32, %s168, [#allocation4]
    $region33: #{tpu_custom_call.1} parent=1 // pred_fallthru
      _
    // Predicated region
    $region34: #{tpu_custom_call.1} parent=1 // pred_check
      _
    $region35: #{tpu_custom_call.1} parent=1 // pred_check_branch
      %172 = sbr.rel (0) target = $region37
    $region36: #{tpu_custom_call.1} parent=1 // pred_region
      %174 = dma.done [#allocation4], 32
    $region37: #{tpu_custom_call.1} parent=1 // pred_fallthru
      _
    %175 = vsyncpa [#allocation3], 1
    %176 = vsyncpa [#allocation6], 1
    %177 = vsyncpa [#allocation4], 1

</llo_original>
